<compile_context>
chip_gen: v7x
topology: tpu7x:2x2x1
jax: 0.10.0
libtpu: 0.0.40
codegen_flags: <defaults>
</compile_context>

<pallas_src>
import functools

import jax
import jax.numpy as jnp
import numpy as np
from jax.experimental import pallas as pl
from jax.experimental.pallas import tpu as pltpu

KSIZE = 3  # kernel_size=3 (module default), stride=1, padding=0, bias=False (bn=True)


def _conv_stats_kernel(x_ref, w_ref, mask_ref, y_ref, s_ref,
                       patch_ref, sum_ref, sq_ref, *, OD, Wp, Cin, MP_PAD):
    """Per-sample tile: transposed-conv (as correlation on the padded input) over all OD
    output depth slices, with fused BN partial statistics.

    x_ref     : (Dp, Cin, Hp1*Wp)   padded input, channels on sublanes, flat H*W on lanes
    w_ref     : (Cout, 27*Cin)      folded (spatially flipped) ConvTranspose weight
    mask_ref  : (1, MP_PAD)         1.0 on valid output lanes, 0.0 on W-halo / pad lanes
    y_ref     : (Cout, OD*MP_PAD)   conv output, 128-lane-aligned per-od chunks (halo kept)
    s_ref     : (Cout, 2)           per-sample [sum, sum_of_squares] per channel
    patch_ref : (27*Cin, MP_PAD)    im2col scratch (taps*Cin on sublanes, spatial on lanes)
    sum_ref   : (Cout, MP_PAD)      lane-wise running sum accumulator
    sq_ref    : (Cout, MP_PAD)      lane-wise running sum-of-squares accumulator
    """
    sum_ref[...] = jnp.zeros_like(sum_ref)
    sq_ref[...] = jnp.zeros_like(sq_ref)
    w = w_ref[...]       # hoisted out of the od loop
    m = mask_ref[...]

    @pl.loop(0, OD)
    def _(od):
        # im2col: 27 taps packed along sublanes; every write is full 128-lane width.
        for kd in range(KSIZE):
            plane = x_ref[od + kd]                      # (Cin, Hp1*Wp), dynamic depth index
            for kh in range(KSIZE):
                for kw in range(KSIZE):
                    k = (kd * KSIZE + kh) * KSIZE + kw
                    off = kh * Wp + kw
                    patch_ref[k * Cin:(k + 1) * Cin, :] = (
                        plane[:, off:off + MP_PAD].astype(patch_ref.dtype))

        # Single 27*Cin-deep MXU contraction; result is already (Cout, lanes) -> no transpose.
        y = jnp.dot(w, patch_ref[...], preferred_element_type=jnp.float32)   # (Cout, MP_PAD)

        # 128-lane-aligned, unmasked store of the whole chunk (halo lanes dropped later).
        y_ref[:, pl.ds(pl.multiple_of(od * MP_PAD, MP_PAD), MP_PAD)] = y.astype(y_ref.dtype)

        # Fused BN partial statistics: lane-wise accumulation, halo/pad lanes masked out.
        ym = y * m
        sum_ref[...] += ym
        sq_ref[...] += ym * y          # mask is 0/1, so ym * y == y*y*mask

    # One small stats write per sample (instead of one per (n, od) grid step).
    s_ref[:, 0:1] = jnp.sum(sum_ref[...], axis=1, keepdims=True)
    s_ref[:, 1:2] = jnp.sum(sq_ref[...], axis=1, keepdims=True)


def _bn_relu_kernel(y_ref, sc_ref, sh_ref, o_ref):
    """Apply per-channel scale/shift + ReLU over the whole 128-aligned block in one shot."""
    o_ref[...] = jnp.maximum(y_ref[...] * sc_ref[...] + sh_ref[...], 0.0)


def deconv3d_forward(x, weight, gamma, beta, eps=1e-5, mxu_bf16=False):
    """x: (N, Cin, D, H, W) NCDHW.  weight: (Cin, Cout, 3, 3, 3) (PyTorch ConvTranspose3d).
    Returns NCDHW output of Deconv3d.forward (conv_transpose3d -> bn (train stats) -> relu).
    Set mxu_bf16=True on v6e/v7x to feed the MXU bf16 inputs (f32 accumulation kept)."""
    N, Cin, D, H, W = x.shape
    Cout = weight.shape[1]
    K = KSIZE
    pad = K - 1
    OD, OH, OW = D + K - 1, H + K - 1, W + K - 1
    Dp, Hp, Wp = D + 2 * pad, H + 2 * pad, W + 2 * pad
    Mp = OH * Wp                       # lanes per od chunk (includes the W halo)
    MP_PAD = -(-Mp // 128) * 128       # 128-lane-aligned chunk width
    KC = K * K * K * Cin               # folded contraction depth (108 for Cin=4)

    # Extra zero rows so every 128-wide flat im2col read stays inside its plane.
    need = (K - 1) * Wp + (K - 1) + MP_PAD
    extra_rows = max(0, -(-(need - Hp * Wp) // Wp))
    Hp1 = Hp + extra_rows
    HW1 = Hp1 * Wp

    mxu_dtype = jnp.bfloat16 if mxu_bf16 else jnp.float32

    # --- input glue: (N, Cin, D, H, W) -> (N, Dp, Cin, Hp1*Wp), zero-padded; reshape is
    #     metadata-only.
    xc = jnp.transpose(x, (0, 2, 1, 3, 4)).astype(jnp.float32)       # (N, D, Cin, H, W)
    xp = jnp.pad(xc, ((0, 0), (pad, pad), (0, 0), (pad, pad + extra_rows), (pad, pad)))
    xflat = xp.reshape(N, Dp, Cin, HW1)

    # --- ConvTranspose weight -> correlation weight, folded as (Cout, 27*Cin)
    wflip = jnp.flip(weight.astype(jnp.float32), (2, 3, 4))
    wc = jnp.transpose(wflip, (1, 2, 3, 4, 0)).reshape(Cout, KC).astype(mxu_dtype)

    # --- valid-lane mask (zeros on the Wp-OW halo lanes and the MP_PAD-Mp alignment pad)
    mask_np = np.zeros((1, MP_PAD), np.float32)
    for oh in range(OH):
        mask_np[0, oh * Wp: oh * Wp + OW] = 1.0
    mask = jnp.asarray(mask_np)

    # TODO(synk): for large production shapes (big H/W or Cin) on v7x (64 MiB VMEM), chunk
    # OH inside the od loop and set vmem_limit_bytes explicitly so the im2col scratch stays
    # bounded; at these shapes everything fits trivially.
    conv_out, stats = pl.pallas_call(
        functools.partial(_conv_stats_kernel, OD=OD, Wp=Wp, Cin=Cin, MP_PAD=MP_PAD),
        grid=(N,),
        in_specs=[
            pl.BlockSpec((None, Dp, Cin, HW1), lambda n: (n, 0, 0, 0)),
            pl.BlockSpec((Cout, KC), lambda n: (0, 0)),
            pl.BlockSpec((1, MP_PAD), lambda n: (0, 0)),
        ],
        out_specs=(
            pl.BlockSpec((None, Cout, OD * MP_PAD), lambda n: (n, 0, 0)),
            pl.BlockSpec((None, Cout, 2), lambda n: (n, 0, 0)),
        ),
        out_shape=(
            jax.ShapeDtypeStruct((N, Cout, OD * MP_PAD), jnp.float32),
            jax.ShapeDtypeStruct((N, Cout, 2), jnp.float32),
        ),
        scratch_shapes=[
            pltpu.VMEM((KC, MP_PAD), mxu_dtype),
            pltpu.VMEM((Cout, MP_PAD), jnp.float32),
            pltpu.VMEM((Cout, MP_PAD), jnp.float32),
        ],
        compiler_params=pltpu.CompilerParams(dimension_semantics=("parallel",)),
    )(xflat, wc, mask)

    # --- tiny combine of per-sample partial sums -> per-channel affine (training-mode BN)
    tot = jnp.sum(stats, axis=0)                                  # (Cout, 2)
    cnt = jnp.float32(N * OD * OH * OW)
    mean = tot[:, 0] / cnt
    var = jnp.maximum(tot[:, 1] / cnt - mean * mean, 0.0)         # biased var (PyTorch norm)
    # TODO(synk): E[x^2]-E[x]^2 cancels catastrophically when |mean| >> std; switch to a
    # shifted / two-pass variance if real activations are far from zero-mean.
    scale = gamma.astype(jnp.float32) * jax.lax.rsqrt(var + eps)
    shift = beta.astype(jnp.float32) - mean * scale

    out_pad = pl.pallas_call(
        _bn_relu_kernel,
        grid=(N,),
        in_specs=[
            pl.BlockSpec((None, Cout, OD * MP_PAD), lambda n: (n, 0, 0)),
            pl.BlockSpec((Cout, 1), lambda n: (0, 0)),
            pl.BlockSpec((Cout, 1), lambda n: (0, 0)),
        ],
        out_specs=pl.BlockSpec((None, Cout, OD * MP_PAD), lambda n: (n, 0, 0)),
        out_shape=jax.ShapeDtypeStruct((N, Cout, OD * MP_PAD), jnp.float32),
        compiler_params=pltpu.CompilerParams(dimension_semantics=("parallel",)),
    )(conv_out, scale.reshape(Cout, 1), shift.reshape(Cout, 1))

    # --- final compaction (two tiny XLA slices on ~28% padded bytes): drop the 128-lane
    #     alignment pad, then the W halo.  Reshapes are metadata-only, no transpose needed.
    out = out_pad.reshape(N, Cout, OD, MP_PAD)[:, :, :, :Mp]
    out = out.reshape(N, Cout, OD, OH, Wp)[:, :, :, :, :OW]
    return out


def _reference(x, weight, eps=1e-5):
    """Independent numpy reference straight from the ConvTranspose3d scatter definition,
    then training-mode BatchNorm3d (gamma=1, beta=0) + ReLU."""
    x = np.asarray(x, np.float64)
    w = np.asarray(weight, np.float64)
    N, Cin, D, H, W = x.shape
    Cout = w.shape[1]
    K = KSIZE
    OD, OH, OW = D + K - 1, H + K - 1, W + K - 1
    y = np.zeros((N, Cout, OD, OH, OW), np.float64)
    for kd in range(K):
        for kh in range(K):
            for kw in range(K):
                y[:, :, kd:kd + D, kh:kh + H, kw:kw + W] += np.einsum(
                    'nidhw,io->nodhw', x, w[:, :, kd, kh, kw])
    mean = y.mean(axis=(0, 2, 3, 4), keepdims=True)
    var = y.var(axis=(0, 2, 3, 4), keepdims=True)  # biased, as PyTorch uses for normalization
    out = (y - mean) / np.sqrt(var + eps)
    return np.maximum(out, 0.0)


if __name__ == "__main__":
    key = jax.random.PRNGKey(0)
    k_x, k_w = jax.random.split(key)

    N, Cin, Cout, D, H, W = 2, 4, 8, 8, 8, 8
    x = jax.random.normal(k_x, (N, Cin, D, H, W), jnp.float32)

    # Deterministic xavier-uniform-style init for ConvTranspose3d weight (Cin, Cout, K, K, K)
    fan_in = Cout * KSIZE ** 3
    fan_out = Cin * KSIZE ** 3
    bound = float(np.sqrt(6.0 / (fan_in + fan_out)))
    weight = jax.random.uniform(k_w, (Cin, Cout, KSIZE, KSIZE, KSIZE),
                                jnp.float32, -bound, bound)
    # BatchNorm3d init_bn parameters: weight=1, bias=0
    gamma = jnp.ones((Cout,), jnp.float32)
    beta = jnp.zeros((Cout,), jnp.float32)
    # TODO(synk): BatchNorm running_mean/running_var buffer updates (momentum) are stateful
    # bookkeeping and do not affect the training-mode forward output; not modeled.

    out = jax.jit(deconv3d_forward)(x, weight, gamma, beta)
    out = jax.block_until_ready(out)

    ref = _reference(x, weight)
    np.testing.assert_allclose(np.asarray(out), ref, rtol=1e-4, atol=1e-4)
    print("KERNEL_OK")
</pallas_src>

<mosaic_0001>
module attributes {stable_mosaic.version = 11 : i64} {
  func.func @_conv_stats_kernel(%arg0: i32, %arg1: memref<1x12x4x156xf32, #tpu.memory_space<vmem>>, %arg2: memref<8x108xf32, #tpu.memory_space<vmem>>, %arg3: memref<1x128xf32, #tpu.memory_space<vmem>>, %arg4: memref<1x8x1280xf32, #tpu.memory_space<vmem>>, %arg5: memref<1x8x2xf32, #tpu.memory_space<vmem>>, %arg6: memref<108x128xf32, #tpu.memory_space<vmem>>, %arg7: memref<8x128xf32, #tpu.memory_space<vmem>>, %arg8: memref<8x128xf32, #tpu.memory_space<vmem>>) attributes {dimension_semantics = [#tpu.dimension_semantics<parallel>], iteration_bounds = array<i64: 2>, scalar_prefetch = 0 : i64, scratch_operands = 3 : i64, tpu.core_type = #tpu.core_type<tc>, window_params = [{transform_indices = @transform_0, window_bounds = array<i64: 1, 12, 4, 156>}, {pipeline_mode = #tpu.pipeline_mode<synchronous>, transform_indices = @transform_1, window_bounds = array<i64: 8, 108>}, {pipeline_mode = #tpu.pipeline_mode<synchronous>, transform_indices = @transform_2, window_bounds = array<i64: 1, 128>}, {transform_indices = @transform_3, window_bounds = array<i64: 1, 8, 1280>}, {transform_indices = @transform_4, window_bounds = array<i64: 1, 8, 2>}]} {
    %cst = arith.constant 0.000000e+00 : f32
    %0 = vector.broadcast %cst : f32 to vector<8x128xf32>
    %c0 = arith.constant 0 : index
    %c0_0 = arith.constant 0 : index
    %1 = vector.load %arg7[%c0, %c0_0] : memref<8x128xf32, #tpu.memory_space<vmem>>, vector<8x128xf32>
    tpu.vector_store %arg7[%c0, %c0_0], %0 {strides = array<i32>} : memref<8x128xf32, #tpu.memory_space<vmem>>, vector<8x128xf32>,
    %cst_1 = arith.constant 0.000000e+00 : f32
    %2 = vector.broadcast %cst_1 : f32 to vector<8x128xf32>
    %c0_2 = arith.constant 0 : index
    %c0_3 = arith.constant 0 : index
    %3 = vector.load %arg8[%c0_2, %c0_3] : memref<8x128xf32, #tpu.memory_space<vmem>>, vector<8x128xf32>
    tpu.vector_store %arg8[%c0_2, %c0_3], %2 {strides = array<i32>} : memref<8x128xf32, #tpu.memory_space<vmem>>, vector<8x128xf32>,
    %c0_4 = arith.constant 0 : index
    %c0_5 = arith.constant 0 : index
    %4 = vector.load %arg2[%c0_4, %c0_5] : memref<8x108xf32, #tpu.memory_space<vmem>>, vector<8x108xf32>
    %c0_6 = arith.constant 0 : index
    %c0_7 = arith.constant 0 : index
    %5 = vector.load %arg3[%c0_6, %c0_7] : memref<1x128xf32, #tpu.memory_space<vmem>>, vector<1x128xf32>
    %c0_i32 = arith.constant 0 : i32
    %c10_i32 = arith.constant 10 : i32
    %6 = arith.addi %c0_i32, %c10_i32 : i32
    %c1_i32 = arith.constant 1 : i32
    scf.for %arg9 = %c0_i32 to %6 step %c1_i32  : i32 {
      %c1_i32_20 = arith.constant 1 : i32
      %19 = arith.muli %arg9, %c1_i32_20 : i32
      %c0_i32_21 = arith.constant 0 : i32
      %20 = arith.addi %c0_i32_21, %19 : i32
      %c0_i32_22 = arith.constant 0 : i32
      %21 = arith.addi %20, %c0_i32_22 : i32
      %c0_23 = arith.constant 0 : index
      %22 = arith.index_cast %21 : i32 to index
      %c0_24 = arith.constant 0 : index
      %c0_25 = arith.constant 0 : index
      %23 = vector.load %arg1[%c0_23, %22, %c0_24, %c0_25] : memref<1x12x4x156xf32, #tpu.memory_space<vmem>>, vector<1x1x4x156xf32>
      %24 = vector.shape_cast %23 : vector<1x1x4x156xf32> to vector<4x156xf32>
      %25 = vector.extract_strided_slice %24 {offsets = [0, 0], sizes = [4, 128], strides = [1, 1]} : vector<4x156xf32> to vector<4x128xf32>
      %c0_26 = arith.constant 0 : index
      %c0_27 = arith.constant 0 : index
      %26 = vector.load %arg6[%c0_26, %c0_27] : memref<108x128xf32, #tpu.memory_space<vmem>>, vector<4x128xf32>
      tpu.vector_store %arg6[%c0_26, %c0_27], %25 {strides = array<i32>} : memref<108x128xf32, #tpu.memory_space<vmem>>, vector<4x128xf32>,
      %27 = vector.extract_strided_slice %24 {offsets = [0, 1], sizes = [4, 128], strides = [1, 1]} : vector<4x156xf32> to vector<4x128xf32>
      %c4 = arith.constant 4 : index
      %c0_28 = arith.constant 0 : index
      %28 = vector.load %arg6[%c4, %c0_28] : memref<108x128xf32, #tpu.memory_space<vmem>>, vector<4x128xf32>
      tpu.vector_store %arg6[%c4, %c0_28], %27 {strides = array<i32>} : memref<108x128xf32, #tpu.memory_space<vmem>>, vector<4x128xf32>,
      %29 = vector.extract_strided_slice %24 {offsets = [0, 2], sizes = [4, 128], strides = [1, 1]} : vector<4x156xf32> to vector<4x128xf32>
      %c8 = arith.constant 8 : index
      %c0_29 = arith.constant 0 : index
      %30 = vector.load %arg6[%c8, %c0_29] : memref<108x128xf32, #tpu.memory_space<vmem>>, vector<4x128xf32>
      tpu.vector_store %arg6[%c8, %c0_29], %29 {strides = array<i32>} : memref<108x128xf32, #tpu.memory_space<vmem>>, vector<4x128xf32>,
      %31 = vector.extract_strided_slice %24 {offsets = [0, 12], sizes = [4, 128], strides = [1, 1]} : vector<4x156xf32> to vector<4x128xf32>
      %c12 = arith.constant 12 : index
      %c0_30 = arith.constant 0 : index
      %32 = vector.load %arg6[%c12, %c0_30] : memref<108x128xf32, #tpu.memory_space<vmem>>, vector<4x128xf32>
      tpu.vector_store %arg6[%c12, %c0_30], %31 {strides = array<i32>} : memref<108x128xf32, #tpu.memory_space<vmem>>, vector<4x128xf32>,
      %33 = vector.extract_strided_slice %24 {offsets = [0, 13], sizes = [4, 128], strides = [1, 1]} : vector<4x156xf32> to vector<4x128xf32>
      %c16 = arith.constant 16 : index
      %c0_31 = arith.constant 0 : index
      %34 = vector.load %arg6[%c16, %c0_31] : memref<108x128xf32, #tpu.memory_space<vmem>>, vector<4x128xf32>
      tpu.vector_store %arg6[%c16, %c0_31], %33 {strides = array<i32>} : memref<108x128xf32, #tpu.memory_space<vmem>>, vector<4x128xf32>,
      %35 = vector.extract_strided_slice %24 {offsets = [0, 14], sizes = [4, 128], strides = [1, 1]} : vector<4x156xf32> to vector<4x128xf32>
      %c20 = arith.constant 20 : index
      %c0_32 = arith.constant 0 : index
      %36 = vector.load %arg6[%c20, %c0_32] : memref<108x128xf32, #tpu.memory_space<vmem>>, vector<4x128xf32>
      tpu.vector_store %arg6[%c20, %c0_32], %35 {strides = array<i32>} : memref<108x128xf32, #tpu.memory_space<vmem>>, vector<4x128xf32>,
      %37 = vector.extract_strided_slice %24 {offsets = [0, 24], sizes = [4, 128], strides = [1, 1]} : vector<4x156xf32> to vector<4x128xf32>
      %c24 = arith.constant 24 : index
      %c0_33 = arith.constant 0 : index
      %38 = vector.load %arg6[%c24, %c0_33] : memref<108x128xf32, #tpu.memory_space<vmem>>, vector<4x128xf32>
      tpu.vector_store %arg6[%c24, %c0_33], %37 {strides = array<i32>} : memref<108x128xf32, #tpu.memory_space<vmem>>, vector<4x128xf32>,
      %39 = vector.extract_strided_slice %24 {offsets = [0, 25], sizes = [4, 128], strides = [1, 1]} : vector<4x156xf32> to vector<4x128xf32>
      %c28 = arith.constant 28 : index
      %c0_34 = arith.constant 0 : index
      %40 = vector.load %arg6[%c28, %c0_34] : memref<108x128xf32, #tpu.memory_space<vmem>>, vector<4x128xf32>
      tpu.vector_store %arg6[%c28, %c0_34], %39 {strides = array<i32>} : memref<108x128xf32, #tpu.memory_space<vmem>>, vector<4x128xf32>,
      %41 = vector.extract_strided_slice %24 {offsets = [0, 26], sizes = [4, 128], strides = [1, 1]} : vector<4x156xf32> to vector<4x128xf32>
      %c32 = arith.constant 32 : index
      %c0_35 = arith.constant 0 : index
      %42 = vector.load %arg6[%c32, %c0_35] : memref<108x128xf32, #tpu.memory_space<vmem>>, vector<4x128xf32>
      tpu.vector_store %arg6[%c32, %c0_35], %41 {strides = array<i32>} : memref<108x128xf32, #tpu.memory_space<vmem>>, vector<4x128xf32>,
      %c1_i32_36 = arith.constant 1 : i32
      %43 = arith.addi %20, %c1_i32_36 : i32
      %c0_37 = arith.constant 0 : index
      %44 = arith.index_cast %43 : i32 to index
      %c0_38 = arith.constant 0 : index
      %c0_39 = arith.constant 0 : index
      %45 = vector.load %arg1[%c0_37, %44, %c0_38, %c0_39] : memref<1x12x4x156xf32, #tpu.memory_space<vmem>>, vector<1x1x4x156xf32>
      %46 = vector.shape_cast %45 : vector<1x1x4x156xf32> to vector<4x156xf32>
      %47 = vector.extract_strided_slice %46 {offsets = [0, 0], sizes = [4, 128], strides = [1, 1]} : vector<4x156xf32> to vector<4x128xf32>
      %c36 = arith.constant 36 : index
      %c0_40 = arith.constant 0 : index
      %48 = vector.load %arg6[%c36, %c0_40] : memref<108x128xf32, #tpu.memory_space<vmem>>, vector<4x128xf32>
      tpu.vector_store %arg6[%c36, %c0_40], %47 {strides = array<i32>} : memref<108x128xf32, #tpu.memory_space<vmem>>, vector<4x128xf32>,
      %49 = vector.extract_strided_slice %46 {offsets = [0, 1], sizes = [4, 128], strides = [1, 1]} : vector<4x156xf32> to vector<4x128xf32>
      %c40 = arith.constant 40 : index
      %c0_41 = arith.constant 0 : index
      %50 = vector.load %arg6[%c40, %c0_41] : memref<108x128xf32, #tpu.memory_space<vmem>>, vector<4x128xf32>
      tpu.vector_store %arg6[%c40, %c0_41], %49 {strides = array<i32>} : memref<108x128xf32, #tpu.memory_space<vmem>>, vector<4x128xf32>,
      %51 = vector.extract_strided_slice %46 {offsets = [0, 2], sizes = [4, 128], strides = [1, 1]} : vector<4x156xf32> to vector<4x128xf32>
      %c44 = arith.constant 44 : index
      %c0_42 = arith.constant 0 : index
      %52 = vector.load %arg6[%c44, %c0_42] : memref<108x128xf32, #tpu.memory_space<vmem>>, vector<4x128xf32>
      tpu.vector_store %arg6[%c44, %c0_42], %51 {strides = array<i32>} : memref<108x128xf32, #tpu.memory_space<vmem>>, vector<4x128xf32>,
      %53 = vector.extract_strided_slice %46 {offsets = [0, 12], sizes = [4, 128], strides = [1, 1]} : vector<4x156xf32> to vector<4x128xf32>
      %c48 = arith.constant 48 : index
      %c0_43 = arith.constant 0 : index
      %54 = vector.load %arg6[%c48, %c0_43] : memref<108x128xf32, #tpu.memory_space<vmem>>, vector<4x128xf32>
      tpu.vector_store %arg6[%c48, %c0_43], %53 {strides = array<i32>} : memref<108x128xf32, #tpu.memory_space<vmem>>, vector<4x128xf32>,
      %55 = vector.extract_strided_slice %46 {offsets = [0, 13], sizes = [4, 128], strides = [1, 1]} : vector<4x156xf32> to vector<4x128xf32>
      %c52 = arith.constant 52 : index
      %c0_44 = arith.constant 0 : index
      %56 = vector.load %arg6[%c52, %c0_44] : memref<108x128xf32, #tpu.memory_space<vmem>>, vector<4x128xf32>
      tpu.vector_store %arg6[%c52, %c0_44], %55 {strides = array<i32>} : memref<108x128xf32, #tpu.memory_space<vmem>>, vector<4x128xf32>,
      %57 = vector.extract_strided_slice %46 {offsets = [0, 14], sizes = [4, 128], strides = [1, 1]} : vector<4x156xf32> to vector<4x128xf32>
      %c56 = arith.constant 56 : index
      %c0_45 = arith.constant 0 : index
      %58 = vector.load %arg6[%c56, %c0_45] : memref<108x128xf32, #tpu.memory_space<vmem>>, vector<4x128xf32>
      tpu.vector_store %arg6[%c56, %c0_45], %57 {strides = array<i32>} : memref<108x128xf32, #tpu.memory_space<vmem>>, vector<4x128xf32>,
      %59 = vector.extract_strided_slice %46 {offsets = [0, 24], sizes = [4, 128], strides = [1, 1]} : vector<4x156xf32> to vector<4x128xf32>
      %c60 = arith.constant 60 : index
      %c0_46 = arith.constant 0 : index
      %60 = vector.load %arg6[%c60, %c0_46] : memref<108x128xf32, #tpu.memory_space<vmem>>, vector<4x128xf32>
      tpu.vector_store %arg6[%c60, %c0_46], %59 {strides = array<i32>} : memref<108x128xf32, #tpu.memory_space<vmem>>, vector<4x128xf32>,
      %61 = vector.extract_strided_slice %46 {offsets = [0, 25], sizes = [4, 128], strides = [1, 1]} : vector<4x156xf32> to vector<4x128xf32>
      %c64 = arith.constant 64 : index
      %c0_47 = arith.constant 0 : index
      %62 = vector.load %arg6[%c64, %c0_47] : memref<108x128xf32, #tpu.memory_space<vmem>>, vector<4x128xf32>
      tpu.vector_store %arg6[%c64, %c0_47], %61 {strides = array<i32>} : memref<108x128xf32, #tpu.memory_space<vmem>>, vector<4x128xf32>,
      %63 = vector.extract_strided_slice %46 {offsets = [0, 26], sizes = [4, 128], strides = [1, 1]} : vector<4x156xf32> to vector<4x128xf32>
      %c68 = arith.constant 68 : index
      %c0_48 = arith.constant 0 : index
      %64 = vector.load %arg6[%c68, %c0_48] : memref<108x128xf32, #tpu.memory_space<vmem>>, vector<4x128xf32>
      tpu.vector_store %arg6[%c68, %c0_48], %63 {strides = array<i32>} : memref<108x128xf32, #tpu.memory_space<vmem>>, vector<4x128xf32>,
      %c2_i32 = arith.constant 2 : i32
      %65 = arith.addi %20, %c2_i32 : i32
      %c0_49 = arith.constant 0 : index
      %66 = arith.index_cast %65 : i32 to index
      %c0_50 = arith.constant 0 : index
      %c0_51 = arith.constant 0 : index
      %67 = vector.load %arg1[%c0_49, %66, %c0_50, %c0_51] : memref<1x12x4x156xf32, #tpu.memory_space<vmem>>, vector<1x1x4x156xf32>
      %68 = vector.shape_cast %67 : vector<1x1x4x156xf32> to vector<4x156xf32>
      %69 = vector.extract_strided_slice %68 {offsets = [0, 0], sizes = [4, 128], strides = [1, 1]} : vector<4x156xf32> to vector<4x128xf32>
      %c72 = arith.constant 72 : index
      %c0_52 = arith.constant 0 : index
      %70 = vector.load %arg6[%c72, %c0_52] : memref<108x128xf32, #tpu.memory_space<vmem>>, vector<4x128xf32>
      tpu.vector_store %arg6[%c72, %c0_52], %69 {strides = array<i32>} : memref<108x128xf32, #tpu.memory_space<vmem>>, vector<4x128xf32>,
      %71 = vector.extract_strided_slice %68 {offsets = [0, 1], sizes = [4, 128], strides = [1, 1]} : vector<4x156xf32> to vector<4x128xf32>
      %c76 = arith.constant 76 : index
      %c0_53 = arith.constant 0 : index
      %72 = vector.load %arg6[%c76, %c0_53] : memref<108x128xf32, #tpu.memory_space<vmem>>, vector<4x128xf32>
      tpu.vector_store %arg6[%c76, %c0_53], %71 {strides = array<i32>} : memref<108x128xf32, #tpu.memory_space<vmem>>, vector<4x128xf32>,
      %73 = vector.extract_strided_slice %68 {offsets = [0, 2], sizes = [4, 128], strides = [1, 1]} : vector<4x156xf32> to vector<4x128xf32>
      %c80 = arith.constant 80 : index
      %c0_54 = arith.constant 0 : index
      %74 = vector.load %arg6[%c80, %c0_54] : memref<108x128xf32, #tpu.memory_space<vmem>>, vector<4x128xf32>
      tpu.vector_store %arg6[%c80, %c0_54], %73 {strides = array<i32>} : memref<108x128xf32, #tpu.memory_space<vmem>>, vector<4x128xf32>,
      %75 = vector.extract_strided_slice %68 {offsets = [0, 12], sizes = [4, 128], strides = [1, 1]} : vector<4x156xf32> to vector<4x128xf32>
      %c84 = arith.constant 84 : index
      %c0_55 = arith.constant 0 : index
      %76 = vector.load %arg6[%c84, %c0_55] : memref<108x128xf32, #tpu.memory_space<vmem>>, vector<4x128xf32>
      tpu.vector_store %arg6[%c84, %c0_55], %75 {strides = array<i32>} : memref<108x128xf32, #tpu.memory_space<vmem>>, vector<4x128xf32>,
      %77 = vector.extract_strided_slice %68 {offsets = [0, 13], sizes = [4, 128], strides = [1, 1]} : vector<4x156xf32> to vector<4x128xf32>
      %c88 = arith.constant 88 : index
      %c0_56 = arith.constant 0 : index
      %78 = vector.load %arg6[%c88, %c0_56] : memref<108x128xf32, #tpu.memory_space<vmem>>, vector<4x128xf32>
      tpu.vector_store %arg6[%c88, %c0_56], %77 {strides = array<i32>} : memref<108x128xf32, #tpu.memory_space<vmem>>, vector<4x128xf32>,
      %79 = vector.extract_strided_slice %68 {offsets = [0, 14], sizes = [4, 128], strides = [1, 1]} : vector<4x156xf32> to vector<4x128xf32>
      %c92 = arith.constant 92 : index
      %c0_57 = arith.constant 0 : index
      %80 = vector.load %arg6[%c92, %c0_57] : memref<108x128xf32, #tpu.memory_space<vmem>>, vector<4x128xf32>
      tpu.vector_store %arg6[%c92, %c0_57], %79 {strides = array<i32>} : memref<108x128xf32, #tpu.memory_space<vmem>>, vector<4x128xf32>,
      %81 = vector.extract_strided_slice %68 {offsets = [0, 24], sizes = [4, 128], strides = [1, 1]} : vector<4x156xf32> to vector<4x128xf32>
      %c96 = arith.constant 96 : index
      %c0_58 = arith.constant 0 : index
      %82 = vector.load %arg6[%c96, %c0_58] : memref<108x128xf32, #tpu.memory_space<vmem>>, vector<4x128xf32>
      tpu.vector_store %arg6[%c96, %c0_58], %81 {strides = array<i32>} : memref<108x128xf32, #tpu.memory_space<vmem>>, vector<4x128xf32>,
      %83 = vector.extract_strided_slice %68 {offsets = [0, 25], sizes = [4, 128], strides = [1, 1]} : vector<4x156xf32> to vector<4x128xf32>
      %c100 = arith.constant 100 : index
      %c0_59 = arith.constant 0 : index
      %84 = vector.load %arg6[%c100, %c0_59] : memref<108x128xf32, #tpu.memory_space<vmem>>, vector<4x128xf32>
      tpu.vector_store %arg6[%c100, %c0_59], %83 {strides = array<i32>} : memref<108x128xf32, #tpu.memory_space<vmem>>, vector<4x128xf32>,
      %85 = vector.extract_strided_slice %68 {offsets = [0, 26], sizes = [4, 128], strides = [1, 1]} : vector<4x156xf32> to vector<4x128xf32>
      %c104 = arith.constant 104 : index
      %c0_60 = arith.constant 0 : index
      %86 = vector.load %arg6[%c104, %c0_60] : memref<108x128xf32, #tpu.memory_space<vmem>>, vector<4x128xf32>
      tpu.vector_store %arg6[%c104, %c0_60], %85 {strides = array<i32>} : memref<108x128xf32, #tpu.memory_space<vmem>>, vector<4x128xf32>,
      %c0_61 = arith.constant 0 : index
      %c0_62 = arith.constant 0 : index
      %87 = vector.load %arg6[%c0_61, %c0_62] : memref<108x128xf32, #tpu.memory_space<vmem>>, vector<108x128xf32>
      %cst_63 = arith.constant dense<0.000000e+00> : vector<8x128xf32>
      %88 = tpu.matmul %4, %87, %cst_63 {dimension_numbers = #tpu.dot_dimension_numbers<[1], [0], [0], [1], [0, 0, 1, 1], [], []>} : vector<8x108xf32>, vector<108x128xf32>, vector<8x128xf32> -> vector<8x128xf32>
      %c128_i32 = arith.constant 128 : i32
      %89 = arith.muli %20, %c128_i32 : i32
      %90 = tpu.assume_multiple %89, 128 : i32
      %c0_64 = arith.constant 0 : index
      %c0_65 = arith.constant 0 : index
      %91 = arith.index_cast %90 : i32 to index
      %92 = vector.load %arg4[%c0_64, %c0_65, %91] : memref<1x8x1280xf32, #tpu.memory_space<vmem>>, vector<1x8x128xf32>
      %93 = vector.shape_cast %92 : vector<1x8x128xf32> to vector<8x128xf32>
      %94 = vector.shape_cast %88 : vector<8x128xf32> to vector<1x8x128xf32>
      tpu.vector_store %arg4[%c0_64, %c0_65, %91], %94 {strides = array<i32>} : memref<1x8x1280xf32, #tpu.memory_space<vmem>>, vector<1x8x128xf32>,
      %95 = vector.broadcast %5 : vector<1x128xf32> to vector<8x128xf32>
      %96 = arith.mulf %88, %95 : vector<8x128xf32>
      %c0_66 = arith.constant 0 : index
      %c0_67 = arith.constant 0 : index
      %97 = vector.load %arg7[%c0_66, %c0_67] : memref<8x128xf32, #tpu.memory_space<vmem>>, vector<8x128xf32>
      %98 = arith.addf %97, %96 : vector<8x128xf32>
      %c0_68 = arith.constant 0 : index
      %c0_69 = arith.constant 0 : index
      %99 = vector.load %arg7[%c0_68, %c0_69] : memref<8x128xf32, #tpu.memory_space<vmem>>, vector<8x128xf32>
      tpu.vector_store %arg7[%c0_68, %c0_69], %98 {strides = array<i32>} : memref<8x128xf32, #tpu.memory_space<vmem>>, vector<8x128xf32>,
      %c0_70 = arith.constant 0 : index
      %c0_71 = arith.constant 0 : index
      %100 = vector.load %arg8[%c0_70, %c0_71] : memref<8x128xf32, #tpu.memory_space<vmem>>, vector<8x128xf32>
      %101 = arith.mulf %96, %88 : vector<8x128xf32>
      %102 = arith.addf %100, %101 : vector<8x128xf32>
      %c0_72 = arith.constant 0 : index
      %c0_73 = arith.constant 0 : index
      %103 = vector.load %arg8[%c0_72, %c0_73] : memref<8x128xf32, #tpu.memory_space<vmem>>, vector<8x128xf32>
      tpu.vector_store %arg8[%c0_72, %c0_73], %102 {strides = array<i32>} : memref<8x128xf32, #tpu.memory_space<vmem>>, vector<8x128xf32>,
    }
    %c10_i32_8 = arith.constant 10 : i32
    %c0_9 = arith.constant 0 : index
    %c0_10 = arith.constant 0 : index
    %7 = vector.load %arg7[%c0_9, %c0_10] : memref<8x128xf32, #tpu.memory_space<vmem>>, vector<8x128xf32>
    %cst_11 = arith.constant dense<0.000000e+00> : vector<8xf32>
    %8 = vector.multi_reduction <add>, %7, %cst_11 [1] : vector<8x128xf32> to vector<8xf32>
    %9 = vector.shape_cast %8 : vector<8xf32> to vector<8x1xf32>
    %c0_12 = arith.constant 0 : index
    %c0_13 = arith.constant 0 : index
    %c0_14 = arith.constant 0 : index
    %10 = vector.load %arg5[%c0_12, %c0_13, %c0_14] : memref<1x8x2xf32, #tpu.memory_space<vmem>>, vector<1x8x1xf32>
    %11 = vector.shape_cast %10 : vector<1x8x1xf32> to vector<8x1xf32>
    %12 = vector.shape_cast %9 : vector<8x1xf32> to vector<1x8x1xf32>
    tpu.vector_store %arg5[%c0_12, %c0_13, %c0_14], %12 {strides = array<i32>} : memref<1x8x2xf32, #tpu.memory_space<vmem>>, vector<1x8x1xf32>,
    %c0_15 = arith.constant 0 : index
    %c0_16 = arith.constant 0 : index
    %13 = vector.load %arg8[%c0_15, %c0_16] : memref<8x128xf32, #tpu.memory_space<vmem>>, vector<8x128xf32>
    %cst_17 = arith.constant dense<0.000000e+00> : vector<8xf32>
    %14 = vector.multi_reduction <add>, %13, %cst_17 [1] : vector<8x128xf32> to vector<8xf32>
    %15 = vector.shape_cast %14 : vector<8xf32> to vector<8x1xf32>
    %c0_18 = arith.constant 0 : index
    %c0_19 = arith.constant 0 : index
    %c1 = arith.constant 1 : index
    %16 = vector.load %arg5[%c0_18, %c0_19, %c1] : memref<1x8x2xf32, #tpu.memory_space<vmem>>, vector<1x8x1xf32>
    %17 = vector.shape_cast %16 : vector<1x8x1xf32> to vector<8x1xf32>
    %18 = vector.shape_cast %15 : vector<8x1xf32> to vector<1x8x1xf32>
    tpu.vector_store %arg5[%c0_18, %c0_19, %c1], %18 {strides = array<i32>} : memref<1x8x2xf32, #tpu.memory_space<vmem>>, vector<1x8x1xf32>,
    return
  }
  func.func @transform_0(%arg0: i32) -> (i32, i32, i32, i32) {
    %c0_i32 = arith.constant 0 : i32
    %c0_i32_0 = arith.constant 0 : i32
    %c0_i32_1 = arith.constant 0 : i32
    %c0_i32_2 = arith.constant 0 : i32
    return %arg0, %c0_i32, %c0_i32_0, %c0_i32_1 : i32, i32, i32, i32
  }
  func.func @transform_1(%arg0: i32) -> (i32, i32) {
    %c0_i32 = arith.constant 0 : i32
    %c0_i32_0 = arith.constant 0 : i32
    %c0_i32_1 = arith.constant 0 : i32
    return %c0_i32, %c0_i32_0 : i32, i32
  }
  func.func @transform_2(%arg0: i32) -> (i32, i32) {
    %c0_i32 = arith.constant 0 : i32
    %c0_i32_0 = arith.constant 0 : i32
    %c0_i32_1 = arith.constant 0 : i32
    return %c0_i32, %c0_i32_0 : i32, i32
  }
  func.func @transform_3(%arg0: i32) -> (i32, i32, i32) {
    %c0_i32 = arith.constant 0 : i32
    %c0_i32_0 = arith.constant 0 : i32
    %c0_i32_1 = arith.constant 0 : i32
    return %arg0, %c0_i32, %c0_i32_0 : i32, i32, i32
  }
  func.func @transform_4(%arg0: i32) -> (i32, i32, i32) {
    %c0_i32 = arith.constant 0 : i32
    %c0_i32_0 = arith.constant 0 : i32
    %c0_i32_1 = arith.constant 0 : i32
    return %arg0, %c0_i32, %c0_i32_0 : i32, i32, i32
  }
}

module attributes {stable_mosaic.version = 11 : i64} {
  func.func @_bn_relu_kernel(%arg0: i32, %arg1: memref<1x8x1280xf32, #tpu.memory_space<vmem>>, %arg2: memref<8x1xf32, #tpu.memory_space<vmem>>, %arg3: memref<8x1xf32, #tpu.memory_space<vmem>>, %arg4: memref<1x8x1280xf32, #tpu.memory_space<vmem>>) attributes {dimension_semantics = [#tpu.dimension_semantics<parallel>], iteration_bounds = array<i64: 2>, scalar_prefetch = 0 : i64, scratch_operands = 0 : i64, tpu.core_type = #tpu.core_type<tc>, window_params = [{transform_indices = @transform_0, window_bounds = array<i64: 1, 8, 1280>}, {pipeline_mode = #tpu.pipeline_mode<synchronous>, transform_indices = @transform_1, window_bounds = array<i64: 8, 1>}, {pipeline_mode = #tpu.pipeline_mode<synchronous>, transform_indices = @transform_2, window_bounds = array<i64: 8, 1>}, {transform_indices = @transform_3, window_bounds = array<i64: 1, 8, 1280>}]} {
    %c0 = arith.constant 0 : index
    %c0_0 = arith.constant 0 : index
    %c0_1 = arith.constant 0 : index
    %0 = vector.load %arg1[%c0, %c0_0, %c0_1] : memref<1x8x1280xf32, #tpu.memory_space<vmem>>, vector<1x8x1280xf32>
    %1 = vector.shape_cast %0 : vector<1x8x1280xf32> to vector<8x1280xf32>
    %c0_2 = arith.constant 0 : index
    %c0_3 = arith.constant 0 : index
    %2 = vector.load %arg2[%c0_2, %c0_3] : memref<8x1xf32, #tpu.memory_space<vmem>>, vector<8x1xf32>
    %3 = vector.broadcast %2 : vector<8x1xf32> to vector<8x1280xf32>
    %4 = arith.mulf %1, %3 : vector<8x1280xf32>
    %c0_4 = arith.constant 0 : index
    %c0_5 = arith.constant 0 : index
    %5 = vector.load %arg3[%c0_4, %c0_5] : memref<8x1xf32, #tpu.memory_space<vmem>>, vector<8x1xf32>
    %6 = vector.broadcast %5 : vector<8x1xf32> to vector<8x1280xf32>
    %7 = arith.addf %4, %6 : vector<8x1280xf32>
    %cst = arith.constant 0.000000e+00 : f32
    %8 = vector.broadcast %cst : f32 to vector<8x1280xf32>
    %9 = arith.maximumf %7, %8 : vector<8x1280xf32>
    %c0_6 = arith.constant 0 : index
    %c0_7 = arith.constant 0 : index
    %c0_8 = arith.constant 0 : index
    %10 = vector.load %arg4[%c0_6, %c0_7, %c0_8] : memref<1x8x1280xf32, #tpu.memory_space<vmem>>, vector<1x8x1280xf32>
    %11 = vector.shape_cast %10 : vector<1x8x1280xf32> to vector<8x1280xf32>
    %12 = vector.shape_cast %9 : vector<8x1280xf32> to vector<1x8x1280xf32>
    tpu.vector_store %arg4[%c0_6, %c0_7, %c0_8], %12 {strides = array<i32>} : memref<1x8x1280xf32, #tpu.memory_space<vmem>>, vector<1x8x1280xf32>,
    return
  }
  func.func @transform_0(%arg0: i32) -> (i32, i32, i32) {
    %c0_i32 = arith.constant 0 : i32
    %c0_i32_0 = arith.constant 0 : i32
    %c0_i32_1 = arith.constant 0 : i32
    return %arg0, %c0_i32, %c0_i32_0 : i32, i32, i32
  }
  func.func @transform_1(%arg0: i32) -> (i32, i32) {
    %c0_i32 = arith.constant 0 : i32
    %c0_i32_0 = arith.constant 0 : i32
    %c0_i32_1 = arith.constant 0 : i32
    return %c0_i32, %c0_i32_0 : i32, i32
  }
  func.func @transform_2(%arg0: i32) -> (i32, i32) {
    %c0_i32 = arith.constant 0 : i32
    %c0_i32_0 = arith.constant 0 : i32
    %c0_i32_1 = arith.constant 0 : i32
    return %c0_i32, %c0_i32_0 : i32, i32
  }
  func.func @transform_3(%arg0: i32) -> (i32, i32, i32) {
    %c0_i32 = arith.constant 0 : i32
    %c0_i32_0 = arith.constant 0 : i32
    %c0_i32_1 = arith.constant 0 : i32
    return %arg0, %c0_i32, %c0_i32_0 : i32, i32, i32
  }
}

</mosaic_0001>

<llo_original>
// kernel: deconv3d_forward.3
$region0: #{deconv3d_forward.3}
  #allocation0 [shape = 'u32[]', space=smem, size = 0x4, offset = 0x4, fixed_abs, tag = 'smem constant byte address 0x4 - core index']
  #allocation1 [shape = 'u32[144,128]{1,0:T(1,128)}', space=vmem, size = 0x12000, scoped, tag = 'internal scratch']
  %s0 = inlined_call_operand.vmem [shape: f32[2,8,1280], index: 0, kind: input, shape index: {}]
  %s1 = inlined_call_operand.vmem [shape: f32[8,1], index: 1, kind: input, shape index: {}]
  %s2 = inlined_call_operand.vmem [shape: f32[8,1], index: 2, kind: input, shape index: {}]
  %s3 = inlined_call_operand.vmem [shape: f32[2,8,1280], index: 3, kind: output, shape index: {}]
  %s4 = sld [smem:[#allocation0]]
  $region45: #{deconv3d_forward.3} parent=0
    _
  %s6 = ssub.s32 1, %s4
  %s7 = scalar_select 0, %s6, %s4
  loop: start=0, step=1, limit=4
  $region2: #{deconv3d_forward.3} parent=0 // loop_pre_header
    _
  $region3: #{deconv3d_forward.3} parent=0 // loop_header
    %s9 = sphi 0, %s13
    %p10 = scmp.ge.s32.totalorder %s9, 4
    %s19 = sphi 0, %s21
    %s22 = sphi 0, %s19
    %s23 = sphi 0, %s22
    %s39 = sphi 0, %s23
    %s43 = sphi 0, %s43
    %s45 = sphi 0, %s43
    %s46 = sphi 0, %s45
    %s60 = sphi 0, %s46
    %s64 = sphi 0, %s64
    %s66 = sphi 0, %s64
    %s67 = sphi 0, %s66
    %s81 = sphi 0, %s67
    %s87 = sphi 0, %s89
    %s90 = sphi 0, %s87
    %s91 = sphi 0, %s90
    %s107 = sphi 0, %s91
  $region4: #{deconv3d_forward.3} parent=0 // loop_header_branch
    %12 = sbr.rel (%p10) target = $region8
  $region5: #{deconv3d_forward.3} parent=0 // loop_body
    %s14 = ssub.s32 %s9, 1
    %s15 = ssub.s32 %s9, 2
    %s16 = sadd.s32 %s9, 1
    %s17 = ssub.s32 %s9, %s16
    %p18 = scmp.eq.s32.totalorder %s17, 0
    %s20 = sadd.s32 %s19, 1
    %s21 = scalar_select %p18, %s19, %s20
    %p24 = pneg %p18
    %p25 = scmp.eq.s32.totalorder %s9, 1
    %p26 = por %p24, %p25
    %p27 = scmp.ne.s32.totalorder %s19, %s22
    %p28 = scmp.eq.s32.totalorder %s9, 0
    %p29 = por %p27, %p28
    %p30 = scmp.ne.s32.totalorder %s19, %s22
    %p31 = scmp.eq.s32.totalorder %s14, 1
    %p32 = por %p30, %p31
    %p33 = scmp.ne.s32.totalorder %s22, %s23
    %p34 = scmp.eq.s32.totalorder %s14, 0
    %p35 = por %p33, %p34
    %p36 = scmp.ne.s32.totalorder %s22, %s23
    %p37 = scmp.eq.s32.totalorder %s15, 1
    %p38 = por %p36, %p37
    %p40 = scmp.ne.s32.totalorder %s23, %s39
    %p41 = scmp.eq.s32.totalorder %s15, 0
    %p42 = por %p40, %p41
    %s44 = sadd.s32 %s43, 1
    %p47 = scmp.eq.s32.totalorder %s9, 1
    %p48 = scmp.ne.s32.totalorder %s43, %s45
    %p49 = scmp.eq.s32.totalorder %s9, 0
    %p50 = por %p48, %p49
    %p51 = scmp.ne.s32.totalorder %s43, %s45
    %p52 = scmp.eq.s32.totalorder %s14, 1
    %p53 = por %p51, %p52
    %p54 = scmp.ne.s32.totalorder %s45, %s46
    %p55 = scmp.eq.s32.totalorder %s14, 0
    %p56 = por %p54, %p55
    %p57 = scmp.ne.s32.totalorder %s45, %s46
    %p58 = scmp.eq.s32.totalorder %s15, 1
    %p59 = por %p57, %p58
    %p61 = scmp.ne.s32.totalorder %s46, %s60
    %p62 = scmp.eq.s32.totalorder %s15, 0
    %p63 = por %p61, %p62
    %s65 = sadd.s32 %s64, 1
    %p68 = scmp.eq.s32.totalorder %s9, 1
    %p69 = scmp.ne.s32.totalorder %s64, %s66
    %p70 = scmp.eq.s32.totalorder %s9, 0
    %p71 = por %p69, %p70
    %p72 = scmp.ne.s32.totalorder %s64, %s66
    %p73 = scmp.eq.s32.totalorder %s14, 1
    %p74 = por %p72, %p73
    %p75 = scmp.ne.s32.totalorder %s66, %s67
    %p76 = scmp.eq.s32.totalorder %s14, 0
    %p77 = por %p75, %p76
    %p78 = scmp.ne.s32.totalorder %s66, %s67
    %p79 = scmp.eq.s32.totalorder %s15, 1
    %p80 = por %p78, %p79
    %p82 = scmp.ne.s32.totalorder %s67, %s81
    %p83 = scmp.eq.s32.totalorder %s15, 0
    %p84 = por %p82, %p83
    %s85 = ssub.s32 %s9, %s16
    %p86 = scmp.eq.s32.totalorder %s85, 0
    %s88 = sadd.s32 %s87, 1
    %s89 = scalar_select %p86, %s87, %s88
    %p92 = pneg %p86
    %p93 = scmp.eq.s32.totalorder %s9, 1
    %p94 = por %p92, %p93
    %p95 = scmp.ne.s32.totalorder %s87, %s90
    %p96 = scmp.eq.s32.totalorder %s9, 0
    %p97 = por %p95, %p96
    %p98 = scmp.ne.s32.totalorder %s87, %s90
    %p99 = scmp.eq.s32.totalorder %s14, 1
    %p100 = por %p98, %p99
    %p101 = scmp.ne.s32.totalorder %s90, %s91
    %p102 = scmp.eq.s32.totalorder %s14, 0
    %p103 = por %p101, %p102
    %p104 = scmp.ne.s32.totalorder %s90, %s91
    %p105 = scmp.eq.s32.totalorder %s15, 1
    %p106 = por %p104, %p105
    %p108 = scmp.ne.s32.totalorder %s91, %s107
    %p109 = scmp.eq.s32.totalorder %s15, 0
    %p110 = por %p108, %p109
    %p111 = scmp.le.s32.totalorder 1, %s9
    %p112 = scmp.lt.s32.totalorder %s9, 3
    %p113 = pnand %p111, %p112
    %p114 = pneg %p113
    // Predicated region
    $region9: #{deconv3d_forward.3} parent=5 // pred_check
      _
    $region10: #{deconv3d_forward.3} parent=5 // pred_check_branch
      %116 = sbr.rel (%p113) target = $region12
    $region11: #{deconv3d_forward.3} parent=5 // pred_region
      %s117 = ssub.s32 %s9, 1
      // Predicated region
      $region13: #{deconv3d_forward.3} parent=11 // pred_check
        %p118 = pneg %p56
      $region14: #{deconv3d_forward.3} parent=11 // pred_check_branch
        %120 = sbr.rel (%p118) target = $region16
      $region15: #{deconv3d_forward.3} parent=11 // pred_region
        _
      $region16: #{deconv3d_forward.3} parent=11 // pred_fallthru
        _
      // Predicated region
      $region17: #{deconv3d_forward.3} parent=11 // pred_check
        %p121 = pneg %p77
      $region18: #{deconv3d_forward.3} parent=11 // pred_check_branch
        %123 = sbr.rel (%p121) target = $region20
      $region19: #{deconv3d_forward.3} parent=11 // pred_region
        _
      $region20: #{deconv3d_forward.3} parent=11 // pred_fallthru
        _
    $region12: #{deconv3d_forward.3} parent=5 // pred_fallthru
      _
    %p124 = scmp.lt.s32.totalorder %s9, 2
    // Predicated region
    $region21: #{deconv3d_forward.3} parent=5 // pred_check
      %p125 = pneg %p124
    $region22: #{deconv3d_forward.3} parent=5 // pred_check_branch
      %127 = sbr.rel (%p125) target = $region24
    $region23: #{deconv3d_forward.3} parent=5 // pred_region
      // Predicated region
      $region25: #{deconv3d_forward.3} parent=23 // pred_check
        %p128 = pneg %p29
      $region26: #{deconv3d_forward.3} parent=23 // pred_check_branch
        %130 = sbr.rel (%p128) target = $region28
      $region27: #{deconv3d_forward.3} parent=23 // pred_region
        %p131 = scmp.lt.s32.totalorder %s9, 1
        %s132 = scalar_select %p131, %s9, 1
        %s133 = smul.addr %s132, 10
        %s134 = smul.addr %s133, 8
        %s135 = scalar_lea.vmem %s0, %s134
      $region28: #{deconv3d_forward.3} parent=23 // pred_fallthru
        _
    $region24: #{deconv3d_forward.3} parent=5 // pred_fallthru
      _
    %p136 = scmp.le.s32.totalorder 1, %s9
    %p137 = scmp.lt.s32.totalorder %s9, 3
    %p138 = pnand %p136, %p137
    %p139 = pneg %p138
    // Predicated region
    $region29: #{deconv3d_forward.3} parent=5 // pred_check
      _
    $region30: #{deconv3d_forward.3} parent=5 // pred_check_branch
      %141 = sbr.rel (%p138) target = $region32
    $region31: #{deconv3d_forward.3} parent=5 // pred_region
      %s142 = ssub.s32 %s9, 1
      %p143 = scmp.lt.s32.totalorder %s14, 1
      %s144 = scalar_select %p143, %s14, 1
      %s145 = smul.addr %s144, 10
      %s146 = smul.addr %s145, 8
      %s147 = scalar_lea.vmem %s0, %s146
      %p148 = pneg %p35
      %p149 = pneg %p32
      %p150 = pneg %p56
      %p151 = pneg %p53
      %p152 = pneg %p77
      %p153 = pneg %p74
      %p154 = pneg %p103
      %p155 = pneg %p100
      %p156 = scmp.lt.s32.totalorder %s14, 1
      %s157 = scalar_select %p156, %s14, 1
      %s158 = smul.addr %s157, 10
      %s159 = smul.addr %s158, 8
      %s160 = scalar_lea.vmem %s3, %s159
      %p161 = scmp.lt.s32.totalorder %s14, 1
      %s162 = scalar_select %p161, %s14, 1
      %s163 = smul.addr %s162, 10
      %s164 = smul.addr %s163, 8
      %s165 = scalar_lea.vmem %s0, %s164
      %p166 = scmp.lt.s32.totalorder %s14, 1
      %s167 = scalar_select %p166, %s14, 1
      %s168 = smul.addr %s167, 10
      %s169 = smul.addr %s168, 8
      %s170 = scalar_lea.vmem %s3, %s169
      %v171 = vld [vmem:[%s165] sm:$0xff]
      %v172 = vld [vmem:[%s165 + $0x8] sm:$0xff]
      %v173 = vld [vmem:[%s165 + $0x10] sm:$0xff]
      %v174 = vld [vmem:[%s165 + $0x18] sm:$0xff]
      %v175 = vld [vmem:[%s165 + $0x20] sm:$0xff]
      %v176 = vld [vmem:[%s165 + $0x28] sm:$0xff]
      %v177 = vld [vmem:[%s165 + $0x30] sm:$0xff]
      %v178 = vld [vmem:[%s165 + $0x38] sm:$0xff]
      %v179 = vld [vmem:[%s165 + $0x40] sm:$0xff]
      %v180 = vld [vmem:[%s165 + $0x48] sm:$0xff]
      %v181 = vld [vmem:[%s1] sm:$0xff]
      %183 = vset.pattern.permute.xlu0 0
      %184 = vperm.xlu0 %183, %v181
      %v185 = vpop.permute.xlu0 %184
      %v187 = vmul.f32 %v171, %v185
      %v188 = vmul.f32 %v172, %v185
      %v189 = vmul.f32 %v173, %v185
      %v190 = vmul.f32 %v174, %v185
      %v191 = vmul.f32 %v175, %v185
      %v192 = vmul.f32 %v176, %v185
      %v193 = vmul.f32 %v177, %v185
      %v194 = vmul.f32 %v178, %v185
      %v195 = vmul.f32 %v179, %v185
      %v196 = vmul.f32 %v180, %v185
      %v197 = vld [vmem:[%s2] sm:$0xff]
      %199 = vset.pattern.permute.xlu0 0
      %200 = vperm.xlu0 %199, %v197
      %v201 = vpop.permute.xlu0 %200
      %v203 = vadd.f32 %v187, %v201
      %v204 = vadd.f32 %v188, %v201
      %v205 = vadd.f32 %v189, %v201
      %v206 = vadd.f32 %v190, %v201
      %v207 = vadd.f32 %v191, %v201
      %v208 = vadd.f32 %v192, %v201
      %v209 = vadd.f32 %v193, %v201
      %v210 = vadd.f32 %v194, %v201
      %v211 = vadd.f32 %v195, %v201
      %v212 = vadd.f32 %v196, %v201
      %v213 = vmax.f32 %v203, 0.0
      %v214 = vmax.f32 %v204, 0.0
      %v215 = vmax.f32 %v205, 0.0
      %v216 = vmax.f32 %v206, 0.0
      %v217 = vmax.f32 %v207, 0.0
      %v218 = vmax.f32 %v208, 0.0
      %v219 = vmax.f32 %v209, 0.0
      %v220 = vmax.f32 %v210, 0.0
      %v221 = vmax.f32 %v211, 0.0
      %v222 = vmax.f32 %v212, 0.0
      %223 = vst [vmem:[%s170] sm:$0xff] %v213
      %224 = vst [vmem:[%s170 + $0x8] sm:$0xff] %v214
      %225 = vst [vmem:[%s170 + $0x10] sm:$0xff] %v215
      %226 = vst [vmem:[%s170 + $0x18] sm:$0xff] %v216
      %227 = vst [vmem:[%s170 + $0x20] sm:$0xff] %v217
      %228 = vst [vmem:[%s170 + $0x28] sm:$0xff] %v218
      %229 = vst [vmem:[%s170 + $0x30] sm:$0xff] %v219
      %230 = vst [vmem:[%s170 + $0x38] sm:$0xff] %v220
      %231 = vst [vmem:[%s170 + $0x40] sm:$0xff] %v221
      %232 = vst [vmem:[%s170 + $0x48] sm:$0xff] %v222
      %p233 = scmp.lt.s32.totalorder %s14, 1
      %s234 = scalar_select %p233, %s14, 1
      %s235 = smul.addr %s234, 10
      %s236 = smul.addr %s235, 8
      %s237 = scalar_lea.vmem %s3, %s236
      // Predicated region
      $region33: #{deconv3d_forward.3} parent=31 // pred_check
        %p238 = pneg %p100
      $region34: #{deconv3d_forward.3} parent=31 // pred_check_branch
        %240 = sbr.rel (%p238) target = $region36
      $region35: #{deconv3d_forward.3} parent=31 // pred_region
        _
      $region36: #{deconv3d_forward.3} parent=31 // pred_fallthru
        _
    $region32: #{deconv3d_forward.3} parent=5 // pred_fallthru
      _
    %p241 = scmp.le.s32.totalorder 2, %s9
    // Predicated region
    $region37: #{deconv3d_forward.3} parent=5 // pred_check
      %p242 = pneg %p241
    $region38: #{deconv3d_forward.3} parent=5 // pred_check_branch
      %244 = sbr.rel (%p242) target = $region40
    $region39: #{deconv3d_forward.3} parent=5 // pred_region
      %s245 = ssub.s32 %s9, 2
      // Predicated region
      $region41: #{deconv3d_forward.3} parent=39 // pred_check
        %p246 = pneg %p106
      $region42: #{deconv3d_forward.3} parent=39 // pred_check_branch
        %248 = sbr.rel (%p246) target = $region44
      $region43: #{deconv3d_forward.3} parent=39 // pred_region
        %p249 = scmp.lt.s32.totalorder %s15, 1
        %s250 = scalar_select %p249, %s15, 1
        %s251 = smul.addr %s250, 10
        %s252 = smul.addr %s251, 8
        %s253 = scalar_lea.vmem %s3, %s252
      $region44: #{deconv3d_forward.3} parent=39 // pred_fallthru
        _
    $region40: #{deconv3d_forward.3} parent=5 // pred_fallthru
      _
  $region6: #{deconv3d_forward.3} parent=0 // loop_footer
    %s13 = sadd.s32 1, %s9
  $region7: #{deconv3d_forward.3} parent=0 // loop_footer_branch
    %8 = sbr.rel target = $region3
  $region8: #{deconv3d_forward.3} parent=0 // loop_exit
    _

// kernel: deconv3d_forward.2
$region0: #{deconv3d_forward.2}
  #allocation0 [shape = 'u32[]', space=smem, size = 0x4, offset = 0x4, fixed_abs, tag = 'smem constant byte address 0x4 - core index']
  #allocation1 [shape = 'u32[144,128]{1,0:T(1,128)}', space=vmem, size = 0x12000, scoped, tag = 'internal scratch']
  #allocation2 [shape = 'f32[108,128]{1,0:T(8,128)}', space=vmem, size = 0xe000, scoped, tag = 'scratch operand']
  #allocation3 [shape = 'f32[8,128]{1,0:T(8,128)}', space=vmem, size = 0x1000, scoped, tag = 'scratch operand']
  #allocation4 [shape = 'f32[8,128]{1,0:T(8,128)}', space=vmem, size = 0x1000, scoped, tag = 'scratch operand']
  %s0 = inlined_call_operand.vmem [shape: f32[2,12,4,156], index: 0, kind: input, shape index: {}]
  %s1 = inlined_call_operand.vmem [shape: f32[8,108], index: 1, kind: input, shape index: {}]
  %s2 = inlined_call_operand.vmem [shape: f32[1,128], index: 2, kind: input, shape index: {}]
  %s3 = inlined_call_operand.vmem [shape: f32[2,8,1280], index: 3, kind: output, shape index: {0}]
  %s4 = inlined_call_operand.vmem [shape: f32[2,8,2], index: 4, kind: output, shape index: {1}]
  %5 = xla_tuple %s3, %s4
  %s6 = sld [smem:[#allocation0]]
  $region60: #{deconv3d_forward.2} parent=0
    _
  %s8 = ssub.s32 1, %s6
  %s9 = scalar_select 0, %s8, %s6
  loop: start=0, step=1, limit=4
  $region2: #{deconv3d_forward.2} parent=0 // loop_pre_header
    _
  $region3: #{deconv3d_forward.2} parent=0 // loop_header
    %s11 = sphi 0, %s15
    %p12 = scmp.ge.s32.totalorder %s11, 4
    %s21 = sphi 0, %s23
    %s24 = sphi 0, %s21
    %s25 = sphi 0, %s24
    %s41 = sphi 0, %s25
    %s45 = sphi 0, %s45
    %s47 = sphi 0, %s45
    %s48 = sphi 0, %s47
    %s62 = sphi 0, %s48
    %s66 = sphi 0, %s66
    %s68 = sphi 0, %s66
    %s69 = sphi 0, %s68
    %s83 = sphi 0, %s69
    %s89 = sphi 0, %s91
    %s92 = sphi 0, %s89
    %s93 = sphi 0, %s92
    %s109 = sphi 0, %s93
    %s115 = sphi 0, %s117
    %s118 = sphi 0, %s115
    %s119 = sphi 0, %s118
    %s135 = sphi 0, %s119
  $region4: #{deconv3d_forward.2} parent=0 // loop_header_branch
    %14 = sbr.rel (%p12) target = $region8
  $region5: #{deconv3d_forward.2} parent=0 // loop_body
    %s16 = ssub.s32 %s11, 1
    %s17 = ssub.s32 %s11, 2
    %s18 = sadd.s32 %s11, 1
    %s19 = ssub.s32 %s11, %s18
    %p20 = scmp.eq.s32.totalorder %s19, 0
    %s22 = sadd.s32 %s21, 1
    %s23 = scalar_select %p20, %s21, %s22
    %p26 = pneg %p20
    %p27 = scmp.eq.s32.totalorder %s11, 1
    %p28 = por %p26, %p27
    %p29 = scmp.ne.s32.totalorder %s21, %s24
    %p30 = scmp.eq.s32.totalorder %s11, 0
    %p31 = por %p29, %p30
    %p32 = scmp.ne.s32.totalorder %s21, %s24
    %p33 = scmp.eq.s32.totalorder %s16, 1
    %p34 = por %p32, %p33
    %p35 = scmp.ne.s32.totalorder %s24, %s25
    %p36 = scmp.eq.s32.totalorder %s16, 0
    %p37 = por %p35, %p36
    %p38 = scmp.ne.s32.totalorder %s24, %s25
    %p39 = scmp.eq.s32.totalorder %s17, 1
    %p40 = por %p38, %p39
    %p42 = scmp.ne.s32.totalorder %s25, %s41
    %p43 = scmp.eq.s32.totalorder %s17, 0
    %p44 = por %p42, %p43
    %s46 = sadd.s32 %s45, 1
    %p49 = scmp.eq.s32.totalorder %s11, 1
    %p50 = scmp.ne.s32.totalorder %s45, %s47
    %p51 = scmp.eq.s32.totalorder %s11, 0
    %p52 = por %p50, %p51
    %p53 = scmp.ne.s32.totalorder %s45, %s47
    %p54 = scmp.eq.s32.totalorder %s16, 1
    %p55 = por %p53, %p54
    %p56 = scmp.ne.s32.totalorder %s47, %s48
    %p57 = scmp.eq.s32.totalorder %s16, 0
    %p58 = por %p56, %p57
    %p59 = scmp.ne.s32.totalorder %s47, %s48
    %p60 = scmp.eq.s32.totalorder %s17, 1
    %p61 = por %p59, %p60
    %p63 = scmp.ne.s32.totalorder %s48, %s62
    %p64 = scmp.eq.s32.totalorder %s17, 0
    %p65 = por %p63, %p64
    %s67 = sadd.s32 %s66, 1
    %p70 = scmp.eq.s32.totalorder %s11, 1
    %p71 = scmp.ne.s32.totalorder %s66, %s68
    %p72 = scmp.eq.s32.totalorder %s11, 0
    %p73 = por %p71, %p72
    %p74 = scmp.ne.s32.totalorder %s66, %s68
    %p75 = scmp.eq.s32.totalorder %s16, 1
    %p76 = por %p74, %p75
    %p77 = scmp.ne.s32.totalorder %s68, %s69
    %p78 = scmp.eq.s32.totalorder %s16, 0
    %p79 = por %p77, %p78
    %p80 = scmp.ne.s32.totalorder %s68, %s69
    %p81 = scmp.eq.s32.totalorder %s17, 1
    %p82 = por %p80, %p81
    %p84 = scmp.ne.s32.totalorder %s69, %s83
    %p85 = scmp.eq.s32.totalorder %s17, 0
    %p86 = por %p84, %p85
    %s87 = ssub.s32 %s11, %s18
    %p88 = scmp.eq.s32.totalorder %s87, 0
    %s90 = sadd.s32 %s89, 1
    %s91 = scalar_select %p88, %s89, %s90
    %p94 = pneg %p88
    %p95 = scmp.eq.s32.totalorder %s11, 1
    %p96 = por %p94, %p95
    %p97 = scmp.ne.s32.totalorder %s89, %s92
    %p98 = scmp.eq.s32.totalorder %s11, 0
    %p99 = por %p97, %p98
    %p100 = scmp.ne.s32.totalorder %s89, %s92
    %p101 = scmp.eq.s32.totalorder %s16, 1
    %p102 = por %p100, %p101
    %p103 = scmp.ne.s32.totalorder %s92, %s93
    %p104 = scmp.eq.s32.totalorder %s16, 0
    %p105 = por %p103, %p104
    %p106 = scmp.ne.s32.totalorder %s92, %s93
    %p107 = scmp.eq.s32.totalorder %s17, 1
    %p108 = por %p106, %p107
    %p110 = scmp.ne.s32.totalorder %s93, %s109
    %p111 = scmp.eq.s32.totalorder %s17, 0
    %p112 = por %p110, %p111
    %s113 = ssub.s32 %s11, %s18
    %p114 = scmp.eq.s32.totalorder %s113, 0
    %s116 = sadd.s32 %s115, 1
    %s117 = scalar_select %p114, %s115, %s116
    %p120 = pneg %p114
    %p121 = scmp.eq.s32.totalorder %s11, 1
    %p122 = por %p120, %p121
    %p123 = scmp.ne.s32.totalorder %s115, %s118
    %p124 = scmp.eq.s32.totalorder %s11, 0
    %p125 = por %p123, %p124
    %p126 = scmp.ne.s32.totalorder %s115, %s118
    %p127 = scmp.eq.s32.totalorder %s16, 1
    %p128 = por %p126, %p127
    %p129 = scmp.ne.s32.totalorder %s118, %s119
    %p130 = scmp.eq.s32.totalorder %s16, 0
    %p131 = por %p129, %p130
    %p132 = scmp.ne.s32.totalorder %s118, %s119
    %p133 = scmp.eq.s32.totalorder %s17, 1
    %p134 = por %p132, %p133
    %p136 = scmp.ne.s32.totalorder %s119, %s135
    %p137 = scmp.eq.s32.totalorder %s17, 0
    %p138 = por %p136, %p137
    %p139 = scmp.le.s32.totalorder 1, %s11
    %p140 = scmp.lt.s32.totalorder %s11, 3
    %p141 = pnand %p139, %p140
    %p142 = pneg %p141
    // Predicated region
    $region9: #{deconv3d_forward.2} parent=5 // pred_check
      _
    $region10: #{deconv3d_forward.2} parent=5 // pred_check_branch
      %144 = sbr.rel (%p141) target = $region12
    $region11: #{deconv3d_forward.2} parent=5 // pred_region
      %s145 = ssub.s32 %s11, 1
      // Predicated region
      $region13: #{deconv3d_forward.2} parent=11 // pred_check
        %p146 = pneg %p58
      $region14: #{deconv3d_forward.2} parent=11 // pred_check_branch
        %148 = sbr.rel (%p146) target = $region16
      $region15: #{deconv3d_forward.2} parent=11 // pred_region
        _
      $region16: #{deconv3d_forward.2} parent=11 // pred_fallthru
        _
      // Predicated region
      $region17: #{deconv3d_forward.2} parent=11 // pred_check
        %p149 = pneg %p79
      $region18: #{deconv3d_forward.2} parent=11 // pred_check_branch
        %151 = sbr.rel (%p149) target = $region20
      $region19: #{deconv3d_forward.2} parent=11 // pred_region
        _
      $region20: #{deconv3d_forward.2} parent=11 // pred_fallthru
        _
    $region12: #{deconv3d_forward.2} parent=5 // pred_fallthru
      _
    %p152 = scmp.lt.s32.totalorder %s11, 2
    // Predicated region
    $region21: #{deconv3d_forward.2} parent=5 // pred_check
      %p153 = pneg %p152
    $region22: #{deconv3d_forward.2} parent=5 // pred_check_branch
      %155 = sbr.rel (%p153) target = $region24
    $region23: #{deconv3d_forward.2} parent=5 // pred_region
      // Predicated region
      $region25: #{deconv3d_forward.2} parent=23 // pred_check
        %p156 = pneg %p31
      $region26: #{deconv3d_forward.2} parent=23 // pred_check_branch
        %158 = sbr.rel (%p156) target = $region28
      $region27: #{deconv3d_forward.2} parent=23 // pred_region
        %p159 = scmp.lt.s32.totalorder %s11, 1
        %s160 = scalar_select %p159, %s11, 1
        %s161 = smul.addr %s160, 24
        %s162 = smul.addr %s161, 4
        %s163 = scalar_lea.vmem %s0, %s162
      $region28: #{deconv3d_forward.2} parent=23 // pred_fallthru
        _
    $region24: #{deconv3d_forward.2} parent=5 // pred_fallthru
      _
    %p164 = scmp.le.s32.totalorder 1, %s11
    %p165 = scmp.lt.s32.totalorder %s11, 3
    %p166 = pnand %p164, %p165
    %p167 = pneg %p166
    // Predicated region
    $region29: #{deconv3d_forward.2} parent=5 // pred_check
      _
    $region30: #{deconv3d_forward.2} parent=5 // pred_check_branch
      %169 = sbr.rel (%p166) target = $region32
    $region31: #{deconv3d_forward.2} parent=5 // pred_region
      %s170 = ssub.s32 %s11, 1
      %p171 = scmp.lt.s32.totalorder %s16, 1
      %s172 = scalar_select %p171, %s16, 1
      %s173 = smul.addr %s172, 24
      %s174 = smul.addr %s173, 4
      %s175 = scalar_lea.vmem %s0, %s174
      %p176 = pneg %p37
      %p177 = pneg %p34
      %p178 = pneg %p58
      %p179 = pneg %p55
      %p180 = pneg %p79
      %p181 = pneg %p76
      %p182 = pneg %p105
      %p183 = pneg %p102
      %p184 = scmp.lt.s32.totalorder %s16, 1
      %s185 = scalar_select %p184, %s16, 1
      %s186 = smul.addr %s185, 10
      %s187 = smul.addr %s186, 8
      %s188 = scalar_lea.vmem %s3, %s187
      %p189 = pneg %p131
      %p190 = pneg %p128
      %p191 = scmp.lt.s32.totalorder %s16, 1
      %s192 = scalar_select %p191, %s16, 1
      %s193 = smul.addr %s192, 8
      %s194 = scalar_lea.vmem %s4, %s193
      %p195 = scmp.lt.s32.totalorder %s16, 1
      %s196 = scalar_select %p195, %s16, 1
      %s197 = smul.addr %s196, 24
      %s198 = smul.addr %s197, 4
      %s199 = scalar_lea.vmem %s0, %s198
      %p200 = scmp.lt.s32.totalorder %s16, 1
      %s201 = scalar_select %p200, %s16, 1
      %s202 = smul.addr %s201, 10
      %s203 = smul.addr %s202, 8
      %s204 = scalar_lea.vmem %s3, %s203
      %p205 = scmp.lt.s32.totalorder %s16, 1
      %s206 = scalar_select %p205, %s16, 1
      %s207 = smul.addr %s206, 8
      %s208 = scalar_lea.vmem %s4, %s207
      %209 = vst [vmem:[#allocation3] sm:$0xff] 0.0
      %210 = vst [vmem:[#allocation4] sm:$0xff] 0.0
      %v211 = vld [vmem:[%s1] sm:$0xff]
      %v212 = vld [vmem:[%s2] sm:$0x1]
      loop: start=0, step=1, limit=10
      $region33: #{deconv3d_forward.2} parent=31 // loop_pre_header
        _
      $region34: #{deconv3d_forward.2} parent=31 // loop_header
        %s214 = sphi 0, %s218
        %p215 = scmp.ge.s32.totalorder %s214, 10
      $region35: #{deconv3d_forward.2} parent=31 // loop_header_branch
        %217 = sbr.rel (%p215) target = $region39
      $region36: #{deconv3d_forward.2} parent=31 // loop_body
        %s219 = smul.u32 %s214, 2
        %s220 = smul.addr %s219, 4
        %s221 = scalar_lea.vmem %s199, %s220
        %v222 = vld [vmem:[%s221] sm:$0xff]
        %223 = vst [vmem:[#allocation2] sm:$0xf] %v222
        %v225 = vcombine.high %v222, %v222
        %226 = vrot.lane.b32.xlu0 %v222, 127
        %v227 = vpop.permute.xlu0 %226
        %228 = vrot.lane.b32.xlu0 %v225, 127
        %v229 = vpop.permute.xlu0 %228
        %vm230 = vcmask 1039360
        %v231 = vsel %vm230, %v227, %v229
        %233 = vst [vmem:[#allocation2 + $0x4] sm:$0xf] %v231
        %234 = vrot.lane.b32.xlu0 %v222, 126
        %v235 = vpop.permute.xlu0 %234
        %236 = vrot.lane.b32.xlu0 %v225, 126
        %v237 = vpop.permute.xlu0 %236
        %vm238 = vcmask 1031168
        %v239 = vsel %vm238, %v235, %v237
        %241 = vst [vmem:[#allocation2 + $0x8] sm:$0xf] %v239
        %242 = vrot.lane.b32.xlu0 %v222, 116
        %v243 = vpop.permute.xlu0 %242
        %244 = vrot.lane.b32.xlu0 %v225, 116
        %v245 = vpop.permute.xlu0 %244
        %vm246 = vcmask 949248
        %v247 = vsel %vm246, %v243, %v245
        %249 = vst [vmem:[#allocation2 + $0xc] sm:$0xf] %v247
        %250 = vrot.lane.b32.xlu0 %v222, 115
        %v251 = vpop.permute.xlu0 %250
        %252 = vrot.lane.b32.xlu0 %v225, 115
        %v253 = vpop.permute.xlu0 %252
        %vm254 = vcmask 941056
        %v255 = vsel %vm254, %v251, %v253
        %257 = vst [vmem:[#allocation2 + $0x10] sm:$0xf] %v255
        %258 = vrot.lane.b32.xlu0 %v222, 114
        %v259 = vpop.permute.xlu0 %258
        %260 = vrot.lane.b32.xlu0 %v225, 114
        %v261 = vpop.permute.xlu0 %260
        %vm262 = vcmask 932864
        %v263 = vsel %vm262, %v259, %v261
        %265 = vst [vmem:[#allocation2 + $0x14] sm:$0xf] %v263
        %266 = vrot.lane.b32.xlu0 %v222, 104
        %v267 = vpop.permute.xlu0 %266
        %268 = vrot.lane.b32.xlu0 %v225, 104
        %v269 = vpop.permute.xlu0 %268
        %vm270 = vcmask 850944
        %v271 = vsel %vm270, %v267, %v269
        %273 = vst [vmem:[#allocation2 + $0x18] sm:$0xf] %v271
        %274 = vrot.lane.b32.xlu0 %v222, 103
        %v275 = vpop.permute.xlu0 %274
        %276 = vrot.lane.b32.xlu0 %v225, 103
        %v277 = vpop.permute.xlu0 %276
        %vm278 = vcmask 842752
        %v279 = vsel %vm278, %v275, %v277
        %281 = vst [vmem:[#allocation2 + $0x1c] sm:$0xf] %v279
        %282 = vrot.lane.b32.xlu0 %v222, 102
        %v283 = vpop.permute.xlu0 %282
        %284 = vrot.lane.b32.xlu0 %v225, 102
        %v285 = vpop.permute.xlu0 %284
        %vm286 = vcmask 834560
        %v287 = vsel %vm286, %v283, %v285
        %289 = vst [vmem:[#allocation2 + $0x20] sm:$0xf] %v287
        %s290 = sadd.s32 %s214, 1
        %s291 = smul.u32 %s290, 2
        %s292 = smul.addr %s291, 4
        %s293 = scalar_lea.vmem %s199, %s292
        %v294 = vld [vmem:[%s293] sm:$0xff]
        %295 = vst [vmem:[#allocation2 + $0x24] sm:$0xf] %v294
        %v297 = vcombine.high %v294, %v294
        %298 = vrot.lane.b32.xlu0 %v294, 127
        %v299 = vpop.permute.xlu0 %298
        %300 = vrot.lane.b32.xlu0 %v297, 127
        %v301 = vpop.permute.xlu0 %300
        %v302 = vsel %vm230, %v299, %v301
        %304 = vst [vmem:[#allocation2 + $0x28] sm:$0xf] %v302
        %305 = vrot.lane.b32.xlu0 %v294, 126
        %v306 = vpop.permute.xlu0 %305
        %307 = vrot.lane.b32.xlu0 %v297, 126
        %v308 = vpop.permute.xlu0 %307
        %v309 = vsel %vm238, %v306, %v308
        %311 = vst [vmem:[#allocation2 + $0x2c] sm:$0xf] %v309
        %312 = vrot.lane.b32.xlu0 %v294, 116
        %v313 = vpop.permute.xlu0 %312
        %314 = vrot.lane.b32.xlu0 %v297, 116
        %v315 = vpop.permute.xlu0 %314
        %v316 = vsel %vm246, %v313, %v315
        %318 = vst [vmem:[#allocation2 + $0x30] sm:$0xf] %v316
        %319 = vrot.lane.b32.xlu0 %v294, 115
        %v320 = vpop.permute.xlu0 %319
        %321 = vrot.lane.b32.xlu0 %v297, 115
        %v322 = vpop.permute.xlu0 %321
        %v323 = vsel %vm254, %v320, %v322
        %325 = vst [vmem:[#allocation2 + $0x34] sm:$0xf] %v323
        %326 = vrot.lane.b32.xlu0 %v294, 114
        %v327 = vpop.permute.xlu0 %326
        %328 = vrot.lane.b32.xlu0 %v297, 114
        %v329 = vpop.permute.xlu0 %328
        %v330 = vsel %vm262, %v327, %v329
        %332 = vst [vmem:[#allocation2 + $0x38] sm:$0xf] %v330
        %333 = vrot.lane.b32.xlu0 %v294, 104
        %v334 = vpop.permute.xlu0 %333
        %335 = vrot.lane.b32.xlu0 %v297, 104
        %v336 = vpop.permute.xlu0 %335
        %v337 = vsel %vm270, %v334, %v336
        %339 = vst [vmem:[#allocation2 + $0x3c] sm:$0xf] %v337
        %340 = vrot.lane.b32.xlu0 %v294, 103
        %v341 = vpop.permute.xlu0 %340
        %342 = vrot.lane.b32.xlu0 %v297, 103
        %v343 = vpop.permute.xlu0 %342
        %v344 = vsel %vm278, %v341, %v343
        %346 = vst [vmem:[#allocation2 + $0x40] sm:$0xf] %v344
        %347 = vrot.lane.b32.xlu0 %v294, 102
        %v348 = vpop.permute.xlu0 %347
        %349 = vrot.lane.b32.xlu0 %v297, 102
        %v350 = vpop.permute.xlu0 %349
        %v351 = vsel %vm286, %v348, %v350
        %353 = vst [vmem:[#allocation2 + $0x44] sm:$0xf] %v351
        %s354 = sadd.s32 %s214, 2
        %s355 = smul.u32 %s354, 2
        %s356 = smul.addr %s355, 4
        %s357 = scalar_lea.vmem %s199, %s356
        %v358 = vld [vmem:[%s357] sm:$0xff]
        %359 = vst [vmem:[#allocation2 + $0x48] sm:$0xf] %v358
        %v361 = vcombine.high %v358, %v358
        %362 = vrot.lane.b32.xlu0 %v358, 127
        %v363 = vpop.permute.xlu0 %362
        %364 = vrot.lane.b32.xlu0 %v361, 127
        %v365 = vpop.permute.xlu0 %364
        %v366 = vsel %vm230, %v363, %v365
        %368 = vst [vmem:[#allocation2 + $0x4c] sm:$0xf] %v366
        %369 = vrot.lane.b32.xlu0 %v358, 126
        %v370 = vpop.permute.xlu0 %369
        %371 = vrot.lane.b32.xlu0 %v361, 126
        %v372 = vpop.permute.xlu0 %371
        %v373 = vsel %vm238, %v370, %v372
        %375 = vst [vmem:[#allocation2 + $0x50] sm:$0xf] %v373
        %376 = vrot.lane.b32.xlu0 %v358, 116
        %v377 = vpop.permute.xlu0 %376
        %378 = vrot.lane.b32.xlu0 %v361, 116
        %v379 = vpop.permute.xlu0 %378
        %v380 = vsel %vm246, %v377, %v379
        %382 = vst [vmem:[#allocation2 + $0x54] sm:$0xf] %v380
        %383 = vrot.lane.b32.xlu0 %v358, 115
        %v384 = vpop.permute.xlu0 %383
        %385 = vrot.lane.b32.xlu0 %v361, 115
        %v386 = vpop.permute.xlu0 %385
        %v387 = vsel %vm254, %v384, %v386
        %389 = vst [vmem:[#allocation2 + $0x58] sm:$0xf] %v387
        %390 = vrot.lane.b32.xlu0 %v358, 114
        %v391 = vpop.permute.xlu0 %390
        %392 = vrot.lane.b32.xlu0 %v361, 114
        %v393 = vpop.permute.xlu0 %392
        %v394 = vsel %vm262, %v391, %v393
        %396 = vst [vmem:[#allocation2 + $0x5c] sm:$0xf] %v394
        %397 = vrot.lane.b32.xlu0 %v358, 104
        %v398 = vpop.permute.xlu0 %397
        %399 = vrot.lane.b32.xlu0 %v361, 104
        %v400 = vpop.permute.xlu0 %399
        %v401 = vsel %vm270, %v398, %v400
        %403 = vst [vmem:[#allocation2 + $0x60] sm:$0xf] %v401
        %404 = vrot.lane.b32.xlu0 %v358, 103
        %v405 = vpop.permute.xlu0 %404
        %406 = vrot.lane.b32.xlu0 %v361, 103
        %v407 = vpop.permute.xlu0 %406
        %v408 = vsel %vm278, %v405, %v407
        %410 = vst [vmem:[#allocation2 + $0x64] sm:$0xf] %v408
        %411 = vrot.lane.b32.xlu0 %v358, 102
        %v412 = vpop.permute.xlu0 %411
        %413 = vrot.lane.b32.xlu0 %v361, 102
        %v414 = vpop.permute.xlu0 %413
        %v415 = vsel %vm286, %v412, %v414
        %417 = vst [vmem:[#allocation2 + $0x68] sm:$0xf] %v415
        %v418 = vld [vmem:[#allocation2] sm:$0xff]
        %v419 = vld [vmem:[#allocation2 + $0x8] sm:$0xff]
        %v420 = vld [vmem:[#allocation2 + $0x10] sm:$0xff]
        %v421 = vld [vmem:[#allocation2 + $0x18] sm:$0xff]
        %v422 = vld [vmem:[#allocation2 + $0x20] sm:$0xff]
        %v423 = vld [vmem:[#allocation2 + $0x28] sm:$0xff]
        %v424 = vld [vmem:[#allocation2 + $0x30] sm:$0xff]
        %v425 = vld [vmem:[#allocation2 + $0x38] sm:$0xff]
        %v426 = vld [vmem:[#allocation2 + $0x40] sm:$0xff]
        %v427 = vld [vmem:[#allocation2 + $0x48] sm:$0xff]
        %v428 = vld [vmem:[#allocation2 + $0x50] sm:$0xff]
        %v429 = vld [vmem:[#allocation2 + $0x58] sm:$0xff]
        %v430 = vld [vmem:[#allocation2 + $0x60] sm:$0xff]
        %v431 = vld [vmem:[#allocation2 + $0x68] sm:$0xf]
        %vm432 = vcmask 883712
        %v434 = vsel %vm432, %v211, 0
        %vm436 = vcmask 1043456
        %v438 = vsel %vm436, %v431, 0
        %440 = vmatprep.subr.mxu0 0.0
        %441 = vmatpush1.msra.mxu0 %v418
        %442 = vmatprep.subr.mxu0 0.0
        %443 = vmatpush1.msra.mxu0 %v419
        %444 = vmatprep.subr.mxu0 0.0
        %445 = vmatpush1.msra.mxu0 %v420
        %446 = vmatprep.subr.mxu0 0.0
        %447 = vmatpush1.msra.mxu0 %v421
        %448 = vmatprep.subr.mxu0 0.0
        %449 = vmatpush1.msra.mxu0 %v422
        %450 = vmatprep.subr.mxu0 0.0
        %451 = vmatpush1.msra.mxu0 %v423
        %452 = vmatprep.subr.mxu0 0.0
        %453 = vmatpush1.msra.mxu0 %v424
        %454 = vmatprep.subr.mxu0 0.0
        %455 = vmatpush1.msra.mxu0 %v425
        %456 = vmatprep.subr.mxu0 0.0
        %457 = vmatpush1.msra.mxu0 %v426
        %458 = vmatprep.subr.mxu0 0.0
        %459 = vmatpush1.msra.mxu0 %v427
        %460 = vmatprep.subr.mxu0 0.0
        %461 = vmatpush1.msra.mxu0 %v428
        %462 = vmatprep.subr.mxu0 0.0
        %463 = vmatpush1.msra.mxu0 %v429
        %464 = vmatprep.subr.mxu0 0.0
        %465 = vmatpush1.msra.mxu0 %v430
        %466 = vmatprep.subr.mxu0 0.0
        %467 = vmatpush1.msra.mxu0 %v438
        %468 = vmatprep.subr.mxu0 0.0
        %469 = vmatpush1.msra.mxu0 0.0
        %470 = vmatprep.subr.mxu0 0.0
        %471 = vmatpush1.msra.mxu0 0.0
        %472 = vmatprep.subr.mxu0 0.0
        %473 = vmatpush1.msra.mxu0 0.0
        %474 = vmatprep.subr.mxu0 0.0
        %475 = vmatpush1.msra.mxu0 0.0
        %476 = vmatprep.subr.mxu0 0.0
        %477 = vmatpush1.msra.mxu0 0.0
        %478 = vmatprep.subr.mxu0 0.0
        %479 = vmatpush1.msra.mxu0 0.0
        %480 = vmatprep.subr.mxu0 0.0
        %481 = vmatpush1.msra.mxu0 0.0
        %482 = vmatprep.subr.mxu0 0.0
        %483 = vmatpush1.msra.mxu0 0.0
        %484 = vmatprep.subr.mxu0 0.0
        %485 = vmatpush1.msra.mxu0 0.0
        %486 = vmatprep.subr.mxu0 0.0
        %487 = vmatpush1.msra.mxu0 0.0
        %488 = vmatprep.subr.mxu0 0.0
        %489 = vmatpush1.msra.mxu0 0.0
        %490 = vmatprep.subr.mxu0 0.0
        %491 = vmatpush1.msra.mxu0 0.0
        %492 = vmatprep.subr.mxu0 0.0
        %493 = vmatpush1.msra.mxu0 0.0
        %494 = vmatprep.subr.mxu0 0.0
        %495 = vmatpush1.msra.mxu0 0.0
        %496 = vmatprep.subr.mxu0 0.0
        %497 = vmatpush1.msra.mxu0 0.0
        %498 = vmatprep.subr.mxu0 0.0
        %499 = vmatpush1.msra.mxu0 0.0
        %500 = vmatprep.subr.mxu0 0.0
        %501 = vmatpush1.msra.mxu0 0.0
        %502 = vmatprep.subr.mxu0 0.0
        %503 = vmatpush1.msra.mxu0 0.0
        %504 = vmatprep.mubr.f32.mxu0 0.0
        %505 = vmatmul.mubr.f32.gmra.mrb[0].mxu0 %v434
        %v506 = vpop.f32.mrb[0].mxu0
        %v507 = vadd.f32 0.0, %v506
        %v508 = vpop.f32.mrb[0].mxu0
        %509 = vdwg.mxu0
        %s510 = smul.u32 %s214, 128
        %s511 = sshra.s32 %s510, 7
        %s512 = sand.u32 %s510, 127
        %s513 = smul.addr %s511, 8
        %s514 = scalar_lea.vmem %s204, %s513
        %515 = vst [vmem:[%s514] sm:$0xff] %v507
        %v517 = vlaneseq
        %v518 = vshrl.u32 %v517, 7
        %v519 = vsub.s32 0, %v518
        %v520 = vrot.slane %v212, %v519
        %v522 = vmul.f32 %v507, %v520
        %v523 = vld [vmem:[#allocation3] sm:$0xff]
        %v524 = vadd.f32 %v523, %v522
        %525 = vst [vmem:[#allocation3] sm:$0xff] %v524
        %v526 = vld [vmem:[#allocation4] sm:$0xff]
        %v527 = vmul.f32 %v522, %v507
        %v528 = vadd.f32 %v526, %v527
        %529 = vst [vmem:[#allocation4] sm:$0xff] %v528
      $region37: #{deconv3d_forward.2} parent=31 // loop_footer
        %s218 = sadd.s32 1, %s214
      $region38: #{deconv3d_forward.2} parent=31 // loop_footer_branch
        %213 = sbr.rel target = $region34
      $region39: #{deconv3d_forward.2} parent=31 // loop_exit
        _
      %v530 = vld [vmem:[#allocation3] sm:$0xff]
      %531 = vadd.xlane.f32.xlu0 %v530
      %v532 = vpop.xlane.xlu0 %531
      %vm533 = vcmask 7168
      %534 = vst.msk [vmem:[%s208] sm:$0xff] %vm533, %v532
      %v535 = vld [vmem:[#allocation4] sm:$0xff]
      %536 = vadd.xlane.f32.xlu0 %v535
      %v537 = vpop.xlane.xlu0 %536
      %vm538 = vcmask 15368
      %539 = vst.msk [vmem:[%s208] sm:$0xff] %vm538, %v537
      %p540 = scmp.lt.s32.totalorder %s16, 1
      %s541 = scalar_select %p540, %s16, 1
      %s542 = smul.addr %s541, 10
      %s543 = smul.addr %s542, 8
      %s544 = scalar_lea.vmem %s3, %s543
      %p545 = scmp.lt.s32.totalorder %s16, 1
      %s546 = scalar_select %p545, %s16, 1
      %s547 = smul.addr %s546, 8
      %s548 = scalar_lea.vmem %s4, %s547
      // Predicated region
      $region40: #{deconv3d_forward.2} parent=31 // pred_check
        %p549 = pneg %p102
      $region41: #{deconv3d_forward.2} parent=31 // pred_check_branch
        %551 = sbr.rel (%p549) target = $region43
      $region42: #{deconv3d_forward.2} parent=31 // pred_region
        _
      $region43: #{deconv3d_forward.2} parent=31 // pred_fallthru
        _
      // Predicated region
      $region44: #{deconv3d_forward.2} parent=31 // pred_check
        %p552 = pneg %p128
      $region45: #{deconv3d_forward.2} parent=31 // pred_check_branch
        %554 = sbr.rel (%p552) target = $region47
      $region46: #{deconv3d_forward.2} parent=31 // pred_region
        _
      $region47: #{deconv3d_forward.2} parent=31 // pred_fallthru
        _
    $region32: #{deconv3d_forward.2} parent=5 // pred_fallthru
      _
    %p555 = scmp.le.s32.totalorder 2, %s11
    // Predicated region
    $region48: #{deconv3d_forward.2} parent=5 // pred_check
      %p556 = pneg %p555
    $region49: #{deconv3d_forward.2} parent=5 // pred_check_branch
      %558 = sbr.rel (%p556) target = $region51
    $region50: #{deconv3d_forward.2} parent=5 // pred_region
      %s559 = ssub.s32 %s11, 2
      // Predicated region
      $region52: #{deconv3d_forward.2} parent=50 // pred_check
        %p560 = pneg %p108
      $region53: #{deconv3d_forward.2} parent=50 // pred_check_branch
        %562 = sbr.rel (%p560) target = $region55
      $region54: #{deconv3d_forward.2} parent=50 // pred_region
        %p563 = scmp.lt.s32.totalorder %s17, 1
        %s564 = scalar_select %p563, %s17, 1
        %s565 = smul.addr %s564, 10
        %s566 = smul.addr %s565, 8
        %s567 = scalar_lea.vmem %s3, %s566
      $region55: #{deconv3d_forward.2} parent=50 // pred_fallthru
        _
      // Predicated region
      $region56: #{deconv3d_forward.2} parent=50 // pred_check
        %p568 = pneg %p134
      $region57: #{deconv3d_forward.2} parent=50 // pred_check_branch
        %570 = sbr.rel (%p568) target = $region59
      $region58: #{deconv3d_forward.2} parent=50 // pred_region
        %p571 = scmp.lt.s32.totalorder %s17, 1
        %s572 = scalar_select %p571, %s17, 1
        %s573 = smul.addr %s572, 8
        %s574 = scalar_lea.vmem %s4, %s573
      $region59: #{deconv3d_forward.2} parent=50 // pred_fallthru
        _
    $region51: #{deconv3d_forward.2} parent=5 // pred_fallthru
      _
  $region6: #{deconv3d_forward.2} parent=0 // loop_footer
    %s15 = sadd.s32 1, %s11
  $region7: #{deconv3d_forward.2} parent=0 // loop_footer_branch
    %10 = sbr.rel target = $region3
  $region8: #{deconv3d_forward.2} parent=0 // loop_exit
    _

</llo_original>
